<compile_context>
chip_gen: v7x
topology: tpu7x:2x2x1
jax: 0.10.0
libtpu: 0.0.40
codegen_flags: <defaults>
</compile_context>

<pallas_src>
import functools
import math

import jax
import jax.numpy as jnp
from jax.experimental import pallas as pl
from jax.experimental.pallas import tpu as pltpu


def _mvc_kernel(w_ref, large_ref, neg_ref, *, threshold, compute_large,
                compute_neg, rows_total, tile_rows, tiles_per_split,
                needs_row_mask):
    p = pl.program_id(0)          # split (TensorCore) index
    i = pl.program_id(1)          # reduction step within the split

    @pl.when(i == 0)
    def _init():
        large_ref[...] = jnp.zeros_like(large_ref)
        neg_ref[...] = jnp.zeros_like(neg_ref)

    def _accumulate(w):
        if compute_large:
            # log(relu(|w| - t) + 1) == log(max(|w| + (1 - t), 1))
            large = jnp.log(jnp.maximum(jnp.abs(w) + (1.0 - threshold), 1.0))
            large_ref[...] += jnp.sum(large, axis=0,
                                      keepdims=True).reshape(large_ref.shape)
        if compute_neg:
            # relu(-w) ** 2 == min(w, 0) ** 2
            neg = jnp.minimum(w, 0.0)
            neg_ref[...] += jnp.sum(neg * neg, axis=0,
                                    keepdims=True).reshape(neg_ref.shape)

    # Cast in-register; no extra HBM pass in the wrapper.
    w = w_ref[...].astype(jnp.float32)

    if not needs_row_mask:
        _accumulate(w)
    else:
        # Only the last (ragged / clamped-virtual) block(s) contain rows past
        # the end of the slab.  Pay the mask cost only on those steps.
        row_start = (p * tiles_per_split + i) * tile_rows
        is_edge = row_start + tile_rows > rows_total

        @pl.when(jnp.logical_not(is_edge))
        def _interior():
            _accumulate(w)

        @pl.when(is_edge)
        def _edge():
            r = jax.lax.broadcasted_iota(jnp.int32, w.shape, 0)
            valid = (row_start + r) < rows_total
            # Masking w itself to 0 neutralizes BOTH terms up to the static
            # analytic correction applied in the wrapper (and kills any
            # NaN/Inf garbage in the out-of-bounds rows).
            _accumulate(jnp.where(valid, w, 0.0))


def _choose_cols(n):
    """Lane-dense column width (multiple of 128), preferring an exact fit."""
    for c in (1024, 512, 256, 128):
        if n % c == 0:
            return c
    if n >= 128:
        return 128            # pad fallback: at most 127 appended zeros
    return max(n, 1)          # tiny tensor: single (1, n) full-extent block


def _as_pos_int(v):
    try:
        v = int(v)
    except (TypeError, ValueError):
        return None
    return v if v >= 1 else None


def _tensorcore_count():
    """Best-effort trace-time TensorCores-per-chip (2 on v7x / megacore)."""
    # TODO(synk): verify on v7x that the leading "parallel" grid axis actually
    # shards across both TensorCores; if the profile shows a single TC
    # streaming, switch to pltpu.CORE_PARALLEL / pl.core_map for that axis.
    get_info = getattr(pltpu, "get_tpu_info", None)
    if get_info is not None:
        try:
            info = get_info()
            for attr in ("num_cores", "core_count", "tensorcore_count",
                         "num_tensorcores", "num_available_cores",
                         "cores_per_chip"):
                v = _as_pos_int(getattr(info, attr, None))
                if v is not None:
                    return v
        except Exception:
            pass
    try:
        devs = jax.devices()
        if devs:
            v = _as_pos_int(getattr(devs[0], "num_cores", None))
            if v is not None:
                return v
    except Exception:
        pass
    return 1


def mvc_regularizer(weights, alpha=1.0, beta=1.0, threshold=5.0,
                    target_tile_bytes=8 * 1024 * 1024, split=None):
    """Pallas implementation of MVCRegularizer.forward(weights).

    alpha / beta / threshold must be static Python numbers (they gate code
    generation, mirroring the `if self.alpha > 0:` in the torch module).
    `split` overrides the TensorCore-count-aware leading parallel split.
    """
    alpha = float(alpha)
    beta = float(beta)
    threshold = float(threshold)
    compute_large = alpha > 0
    compute_neg = beta > 0
    n = int(weights.size)
    if not (compute_large or compute_neg) or n == 0:
        return jnp.float32(0.0)

    cols = _choose_cols(n)
    itemsize = jnp.dtype(weights.dtype).itemsize

    rows_total = -(-n // cols)
    pad_elems = rows_total * cols - n
    flat = weights.reshape(-1)                      # bitcast, no copy
    if pad_elems:
        # Fallback only when no lane-dense width divides n (odd sizes): one
        # whole-tensor copy.  Real weight tensors (n % 128 == 0) never pad.
        flat = jnp.pad(flat, (0, pad_elems))
    w2d = flat.reshape(rows_total, cols)

    # ~8 MiB per input buffer (16 MiB double-buffered) by default; rows are a
    # multiple of 32 and derived from the packed itemsize (bf16/int8 stay
    # vreg-dense).
    tile_rows = max(32, (target_tile_bytes // (cols * itemsize)) // 32 * 32)
    if rows_total <= tile_rows:
        tile_rows = rows_total                      # single full-extent block
        num_blocks = 1
    else:
        num_blocks = -(-rows_total // tile_rows)

    n_split = _tensorcore_count() if split is None else int(split)
    n_split = max(1, min(n_split, num_blocks, 4))
    tiles_per_split = -(-num_blocks // n_split)

    total_rows = n_split * tiles_per_split * tile_rows
    needs_row_mask = total_rows > rows_total        # ragged / virtual blocks
    needs_clamp = n_split * tiles_per_split > num_blocks
    last_block = num_blocks - 1

    if needs_clamp:
        # The (at most one) virtual block re-reads the last real block; its
        # rows are fully masked in-kernel, so contents don't matter.
        in_index_map = lambda p, i: (
            jnp.minimum(p * tiles_per_split + i, last_block), 0)
    else:
        in_index_map = lambda p, i: (p * tiles_per_split + i, 0)

    kernel = functools.partial(
        _mvc_kernel,
        threshold=threshold,
        compute_large=compute_large,
        compute_neg=compute_neg,
        rows_total=rows_total,
        tile_rows=tile_rows,
        tiles_per_split=tiles_per_split,
        needs_row_mask=needs_row_mask,
    )

    tile_bytes = tile_rows * cols * itemsize
    # 2x tile (double-buffered) + outputs + slack; 40 MiB is safe on v5e/v6e
    # (128 MiB physical) and v7x (64 MiB physical per TC).
    vmem_limit = int(max(40 * 2**20, 2 * tile_bytes + 8 * 2**20))

    large_part, neg_part = pl.pallas_call(
        kernel,
        out_shape=(
            jax.ShapeDtypeStruct((n_split, 1, cols), jnp.float32),
            jax.ShapeDtypeStruct((n_split, 1, cols), jnp.float32),
        ),
        grid_spec=pltpu.PrefetchScalarGridSpec(
            num_scalar_prefetch=0,
            grid=(n_split, tiles_per_split),
            in_specs=[pl.BlockSpec((tile_rows, cols), in_index_map)],
            # Output block index is constant along the reduction axis, so the
            # blocks stay VMEM-resident and act as the accumulators directly.
            out_specs=[
                pl.BlockSpec((1, 1, cols), lambda p, i: (p, 0, 0)),
                pl.BlockSpec((1, 1, cols), lambda p, i: (p, 0, 0)),
            ],
        ),
        compiler_params=pltpu.CompilerParams(
            dimension_semantics=("parallel", "arbitrary"),
            vmem_limit_bytes=vmem_limit),
    )(w2d)

    # Analytic correction: every zero-valued extra element (wrapper padding +
    # in-kernel masked rows) added exactly log1p(max(-threshold, 0)) to the
    # large-term sum and 0 to the neg-term sum.
    extra = total_rows * cols - n
    inv_n = 1.0 / float(n)
    loss = jnp.float32(0.0)
    if compute_large:
        large_sum = jnp.sum(large_part)
        zero_val = math.log1p(max(-threshold, 0.0))
        if extra and zero_val != 0.0:
            large_sum = large_sum - jnp.float32(extra * zero_val)
        loss = loss + large_sum * jnp.float32(alpha * inv_n)
    if compute_neg:
        loss = loss + jnp.sum(neg_part) * jnp.float32(beta * inv_n)
    return loss


def _reference(weights, alpha=1.0, beta=1.0, threshold=5.0):
    w = weights.astype(jnp.float32)
    loss = jnp.float32(0.0)
    if alpha > 0:
        large = jnp.log(jnp.maximum(jnp.abs(w) - threshold, 0.0) + 1.0)
        loss = loss + jnp.mean(large) * alpha
    if beta > 0:
        neg = jnp.maximum(-w, 0.0) ** 2
        loss = loss + jnp.mean(neg) * beta
    return loss


if __name__ == "__main__":
    key = jax.random.PRNGKey(0)
    k0, k1, k2, k3 = jax.random.split(key, 4)

    # 1) Conv-style NCHW weights, both terms, default tiling (single tile).
    w = jax.random.normal(k0, (2, 4, 16, 16), dtype=jnp.float32) * 4.0
    got = jax.block_until_ready(mvc_regularizer(w, 1.0, 1.0, 5.0))
    ref = _reference(w, 1.0, 1.0, 5.0)
    assert jnp.allclose(got, ref, rtol=1e-5, atol=1e-6), (got, ref)

    # 2) Odd element count -> pad fallback; negative threshold -> analytic
    #    pad correction; beta == 0 -> neg term statically gated off.
    w_odd = jax.random.normal(k1, (3, 5, 7, 11), dtype=jnp.float32) * 2.0
    got2 = jax.block_until_ready(mvc_regularizer(w_odd, 1.5, 0.0, -0.5))
    ref2 = _reference(w_odd, 1.5, 0.0, -0.5)
    assert jnp.allclose(got2, ref2, rtol=1e-5, atol=1e-6), (got2, ref2)

    # 3) Multi-tile grid, forced 2-way split, ragged last tile + one clamped
    #    virtual tile, negative threshold exercising the masked-row correction.
    w_big = jax.random.normal(k2, (2, 5, 104, 128), dtype=jnp.float32) * 4.0
    got3 = jax.block_until_ready(
        mvc_regularizer(w_big, 0.7, 2.0, -1.0,
                        target_tile_bytes=128 * 1024, split=2))
    ref3 = _reference(w_big, 0.7, 2.0, -1.0)
    assert jnp.allclose(got3, ref3, rtol=1e-5, atol=1e-6), (got3, ref3)

    # 4) bf16 weights -> in-kernel cast, packed-itemsize tile sizing.
    w_bf16 = (jax.random.normal(k3, (2, 4, 16, 32), dtype=jnp.float32)
              * 4.0).astype(jnp.bfloat16)
    got4 = jax.block_until_ready(mvc_regularizer(w_bf16, 1.0, 1.0, 5.0))
    ref4 = _reference(w_bf16, 1.0, 1.0, 5.0)
    assert jnp.allclose(got4, ref4, rtol=1e-5, atol=1e-6), (got4, ref4)

    print("KERNEL_OK")
</pallas_src>

<mosaic_0001>
module attributes {stable_mosaic.version = 11 : i64} {
  func.func @_mvc_kernel(%arg0: i32, %arg1: i32, %arg2: memref<2x1024xf32, #tpu.memory_space<vmem>>, %arg3: memref<1x1x1024xf32, #tpu.memory_space<vmem>>, %arg4: memref<1x1x1024xf32, #tpu.memory_space<vmem>>) attributes {dimension_semantics = [#tpu.dimension_semantics<parallel>, #tpu.dimension_semantics<arbitrary>], iteration_bounds = array<i64: 1, 1>, scalar_prefetch = 0 : i64, scratch_operands = 0 : i64, tpu.core_type = #tpu.core_type<tc>, window_params = [{transform_indices = @transform_0, window_bounds = array<i64: 2, 1024>}, {transform_indices = @transform_1, window_bounds = array<i64: 1, 1, 1024>}, {transform_indices = @transform_2, window_bounds = array<i64: 1, 1, 1024>}]} {
    %c0_i32 = arith.constant 0 : i32
    %0 = arith.cmpi eq, %arg1, %c0_i32 : i32
    %1 = arith.extui %0 : i1 to i32
    %c0_i32_0 = arith.constant 0 : i32
    %2 = arith.cmpi ne, %1, %c0_i32_0 : i32
    scf.if %2 {
      %cst_18 = arith.constant 0.000000e+00 : f32
      %25 = vector.broadcast %cst_18 : f32 to vector<1x1x1024xf32>
      %c0_19 = arith.constant 0 : index
      %c0_20 = arith.constant 0 : index
      %c0_21 = arith.constant 0 : index
      %26 = vector.load %arg3[%c0_19, %c0_20, %c0_21] : memref<1x1x1024xf32, #tpu.memory_space<vmem>>, vector<1x1x1024xf32>
      tpu.vector_store %arg3[%c0_19, %c0_20, %c0_21], %25 {strides = array<i32>} : memref<1x1x1024xf32, #tpu.memory_space<vmem>>, vector<1x1x1024xf32>,
      %cst_22 = arith.constant 0.000000e+00 : f32
      %27 = vector.broadcast %cst_22 : f32 to vector<1x1x1024xf32>
      %c0_23 = arith.constant 0 : index
      %c0_24 = arith.constant 0 : index
      %c0_25 = arith.constant 0 : index
      %28 = vector.load %arg4[%c0_23, %c0_24, %c0_25] : memref<1x1x1024xf32, #tpu.memory_space<vmem>>, vector<1x1x1024xf32>
      tpu.vector_store %arg4[%c0_23, %c0_24, %c0_25], %27 {strides = array<i32>} : memref<1x1x1024xf32, #tpu.memory_space<vmem>>, vector<1x1x1024xf32>,
    } else {
    }
    %c0 = arith.constant 0 : index
    %c0_1 = arith.constant 0 : index
    %3 = vector.load %arg2[%c0, %c0_1] : memref<2x1024xf32, #tpu.memory_space<vmem>>, vector<2x1024xf32>
    %4 = math.absf %3 : vector<2x1024xf32>
    %cst = arith.constant -4.000000e+00 : f32
    %5 = vector.broadcast %cst : f32 to vector<2x1024xf32>
    %6 = arith.addf %4, %5 : vector<2x1024xf32>
    %cst_2 = arith.constant 1.000000e+00 : f32
    %7 = vector.broadcast %cst_2 : f32 to vector<2x1024xf32>
    %8 = arith.maximumf %6, %7 : vector<2x1024xf32>
    %9 = math.log %8 : vector<2x1024xf32>
    %c0_3 = arith.constant 0 : index
    %c0_4 = arith.constant 0 : index
    %c0_5 = arith.constant 0 : index
    %10 = vector.load %arg3[%c0_3, %c0_4, %c0_5] : memref<1x1x1024xf32, #tpu.memory_space<vmem>>, vector<1x1x1024xf32>
    %cst_6 = arith.constant dense<0.000000e+00> : vector<1024xf32>
    %11 = vector.multi_reduction <add>, %9, %cst_6 [0] : vector<2x1024xf32> to vector<1024xf32>
    %12 = vector.shape_cast %11 : vector<1024xf32> to vector<1x1024xf32>
    %13 = vector.shape_cast %12 : vector<1x1024xf32> to vector<1x1x1024xf32>
    %14 = arith.addf %10, %13 : vector<1x1x1024xf32>
    %c0_7 = arith.constant 0 : index
    %c0_8 = arith.constant 0 : index
    %c0_9 = arith.constant 0 : index
    %15 = vector.load %arg3[%c0_7, %c0_8, %c0_9] : memref<1x1x1024xf32, #tpu.memory_space<vmem>>, vector<1x1x1024xf32>
    tpu.vector_store %arg3[%c0_7, %c0_8, %c0_9], %14 {strides = array<i32>} : memref<1x1x1024xf32, #tpu.memory_space<vmem>>, vector<1x1x1024xf32>,
    %cst_10 = arith.constant 0.000000e+00 : f32
    %16 = vector.broadcast %cst_10 : f32 to vector<2x1024xf32>
    %17 = arith.minimumf %3, %16 : vector<2x1024xf32>
    %c0_11 = arith.constant 0 : index
    %c0_12 = arith.constant 0 : index
    %c0_13 = arith.constant 0 : index
    %18 = vector.load %arg4[%c0_11, %c0_12, %c0_13] : memref<1x1x1024xf32, #tpu.memory_space<vmem>>, vector<1x1x1024xf32>
    %19 = arith.mulf %17, %17 : vector<2x1024xf32>
    %cst_14 = arith.constant dense<0.000000e+00> : vector<1024xf32>
    %20 = vector.multi_reduction <add>, %19, %cst_14 [0] : vector<2x1024xf32> to vector<1024xf32>
    %21 = vector.shape_cast %20 : vector<1024xf32> to vector<1x1024xf32>
    %22 = vector.shape_cast %21 : vector<1x1024xf32> to vector<1x1x1024xf32>
    %23 = arith.addf %18, %22 : vector<1x1x1024xf32>
    %c0_15 = arith.constant 0 : index
    %c0_16 = arith.constant 0 : index
    %c0_17 = arith.constant 0 : index
    %24 = vector.load %arg4[%c0_15, %c0_16, %c0_17] : memref<1x1x1024xf32, #tpu.memory_space<vmem>>, vector<1x1x1024xf32>
    tpu.vector_store %arg4[%c0_15, %c0_16, %c0_17], %23 {strides = array<i32>} : memref<1x1x1024xf32, #tpu.memory_space<vmem>>, vector<1x1x1024xf32>,
    return
  }
  func.func @transform_0(%arg0: i32, %arg1: i32) -> (i32, i32) {
    %c1_i32 = arith.constant 1 : i32
    %0 = arith.muli %arg0, %c1_i32 : i32
    %1 = arith.addi %0, %arg1 : i32
    %c0_i32 = arith.constant 0 : i32
    %c0_i32_0 = arith.constant 0 : i32
    return %1, %c0_i32 : i32, i32
  }
  func.func @transform_1(%arg0: i32, %arg1: i32) -> (i32, i32, i32) {
    %c0_i32 = arith.constant 0 : i32
    %c0_i32_0 = arith.constant 0 : i32
    %c0_i32_1 = arith.constant 0 : i32
    return %arg0, %c0_i32, %c0_i32_0 : i32, i32, i32
  }
  func.func @transform_2(%arg0: i32, %arg1: i32) -> (i32, i32, i32) {
    %c0_i32 = arith.constant 0 : i32
    %c0_i32_0 = arith.constant 0 : i32
    %c0_i32_1 = arith.constant 0 : i32
    return %arg0, %c0_i32, %c0_i32_0 : i32, i32, i32
  }
}

</mosaic_0001>

<llo_original>
// kernel: tpu_custom_call.1
$region0: #{tpu_custom_call.1}
  #allocation0 [shape = 'u32[]', space=smem, size = 0x4, offset = 0x4, fixed_abs, tag = 'smem constant byte address 0x4 - core index']
  #allocation1 [shape = 'u32[144,128]{1,0:T(1,128)}', space=vmem, size = 0x12000, scoped, tag = 'internal scratch']
  %s0 = inlined_call_operand.hbm [shape: f32[2,1024], index: 0, kind: input, shape index: {}]
  %s1 = inlined_call_operand.hbm [shape: f32[1,1,1024], index: 1, kind: output, shape index: {0}]
  %s2 = inlined_call_operand.hbm [shape: f32[1,1,1024], index: 2, kind: output, shape index: {1}]
  %3 = xla_tuple %s1, %s2
  %s4 = sld [smem:[#allocation0]]
  $region30: #{tpu_custom_call.1} parent=0
    _
  %s6 = ssub.s32 1, %s4
  %s7 = scalar_select 0, %s6, %s4
  $region1: #{tpu_custom_call.1} parent=0
    #allocation2 [shape = 'u8[8192]{0}', space=vmem, size = 0x2000, scoped, tag = 'input window, operand 0, single buffered']
    #allocation3 [shape = 's32[1]{0}', space=sflag, size = 0x4, scoped, tag = 'scoped memory for tpu_custom_call.1']
    #allocation4 [shape = 's32[1]{0}', space=sflag, size = 0x4, scoped, tag = 'scoped memory for tpu_custom_call.1']
    #allocation5 [shape = 'u8[4096]{0}', space=vmem, size = 0x1000, scoped, tag = 'output window, operand 0, single buffered']
    #allocation6 [shape = 'u8[4096]{0}', space=vmem, size = 0x1000, scoped, tag = 'output window, operand 1, single buffered']
    #allocation7 [shape = 's32[1]{0}', space=sflag, size = 0x4, scoped, tag = 'scoped memory for tpu_custom_call.1']
    %8 = vsyncpa [#allocation3], 0
    %9 = vsyncpa [#allocation4], 0
    %10 = vsyncpa [#allocation7], 0
    // Predicated region
    $region2: #{tpu_custom_call.1} parent=1 // pred_check
      _
    $region3: #{tpu_custom_call.1} parent=1 // pred_check_branch
      %12 = sbr.rel (0) target = $region5
    $region4: #{tpu_custom_call.1} parent=1 // pred_region
      %s13 = sadd.s32 0, 0
      %s15 = ssub.s32 256, 256
      %16 = vsyncadd [#allocation3], %s15
      %s17 = smul.addr %s13, 8
      %s18 = smul.addr %s17, 32
      %s19 = scalar_lea.hbm %s0, %s18
      %s21 = sshll.u32 [#allocation2], 4
      %s22 = int_to_ptr.vmem [resolvable:$true] %s21
      %24 = dma.hbm_to_vmem [thread:$0]  %s19, 256, %s22, [#allocation3]
    $region5: #{tpu_custom_call.1} parent=1 // pred_fallthru
      _
    // Predicated region
    $region6: #{tpu_custom_call.1} parent=1 // pred_check
      _
    $region7: #{tpu_custom_call.1} parent=1 // pred_check_branch
      %26 = sbr.rel (0) target = $region9
    $region8: #{tpu_custom_call.1} parent=1 // pred_region
      %27 = dma.done [#allocation3], 256
    $region9: #{tpu_custom_call.1} parent=1 // pred_fallthru
      _
    %s28 = sadd.s32 0, 0
    %p29 = scmp.eq.s32.totalorder 0, 0
    // Predicated region
    $region10: #{tpu_custom_call.1} parent=1 // pred_check
      %p30 = pneg %p29
    $region11: #{tpu_custom_call.1} parent=1 // pred_check_branch
      %32 = sbr.rel (%p30) target = $region13
    $region12: #{tpu_custom_call.1} parent=1 // pred_region
      %33 = vst [vmem:[#allocation5] sm:$0xff] 0.0
      %34 = vst [vmem:[#allocation6] sm:$0xff] 0.0
    $region13: #{tpu_custom_call.1} parent=1 // pred_fallthru
      _
    %v35 = vld [vmem:[#allocation2] sm:$0xff]
    %v36 = vld [vmem:[#allocation2 + $0x8] sm:$0xff]
    %v37 = vand.u32 2147483647, %v35
    %v38 = vand.u32 2147483647, %v36
    %v39 = vadd.f32 %v37, -4.0
    %v40 = vadd.f32 %v38, -4.0
    %v41 = vmax.f32 %v39, 1.0
    %v42 = vmax.f32 %v40, 1.0
    %v43 = vlog2.pop %v41
    %v44 = vmul.f32 %v43, 0.6931472
    %v45 = vlog2.pop %v42
    %v46 = vmul.f32 %v45, 0.6931472
    %v47 = vld [vmem:[#allocation5] sm:$0xff]
    %v50 = vcombine.high %v44, %v44
    %v52 = vunpack.c.l.s4 1983009808
    %v53 = vunpack.c.0.s8 %v52
    %v54 = vlaneseq
    %v55 = vshrl.u32 %v54, 7
    %v56 = vsub.s32 %v53, %v55
    %v57 = vrot.slane %v44, %v56
    %v59 = vunpack.c.l.s4 1983009808
    %v60 = vunpack.c.0.s8 %v59
    %v61 = vlaneseq
    %v62 = vshrl.u32 %v61, 7
    %v63 = vsub.s32 %v60, %v62
    %v64 = vrot.slane %v50, %v63
    %v65 = vcombine.high %v57, %v57
    %v66 = vcombine.high %v64, %v64
    %v67 = vcombine.high %v46, %v46
    %v69 = vunpack.c.l.s4 1983009808
    %v70 = vunpack.c.0.s8 %v69
    %v71 = vlaneseq
    %v72 = vshrl.u32 %v71, 7
    %v73 = vsub.s32 %v70, %v72
    %v74 = vrot.slane %v46, %v73
    %v76 = vunpack.c.l.s4 1983009808
    %v77 = vunpack.c.0.s8 %v76
    %v78 = vlaneseq
    %v79 = vshrl.u32 %v78, 7
    %v80 = vsub.s32 %v77, %v79
    %v81 = vrot.slane %v67, %v80
    %v82 = vcombine.high %v74, %v74
    %v83 = vcombine.high %v81, %v81
    %vm92 = vcmask 1041408
    %v93 = vsel %vm92, %v57, 0.0
    %v94 = vrot.slane %v93, 4
    %v95 = vadd.f32 %v93, %v94
    %v96 = vrot.slane %v95, 2
    %v97 = vadd.f32 %v95, %v96
    %v98 = vrot.slane %v97, 1
    %v99 = vadd.f32 %v97, %v98
    %v100 = vsel %vm92, %v65, 0.0
    %v101 = vrot.slane %v100, 4
    %v102 = vadd.f32 %v100, %v101
    %v103 = vrot.slane %v102, 2
    %v104 = vadd.f32 %v102, %v103
    %v105 = vrot.slane %v104, 1
    %v106 = vadd.f32 %v104, %v105
    %v107 = vsel %vm92, %v64, 0.0
    %v108 = vrot.slane %v107, 4
    %v109 = vadd.f32 %v107, %v108
    %v110 = vrot.slane %v109, 2
    %v111 = vadd.f32 %v109, %v110
    %v112 = vrot.slane %v111, 1
    %v113 = vadd.f32 %v111, %v112
    %v114 = vsel %vm92, %v66, 0.0
    %v115 = vrot.slane %v114, 4
    %v116 = vadd.f32 %v114, %v115
    %v117 = vrot.slane %v116, 2
    %v118 = vadd.f32 %v116, %v117
    %v119 = vrot.slane %v118, 1
    %v120 = vadd.f32 %v118, %v119
    %v121 = vsel %vm92, %v74, 0.0
    %v122 = vrot.slane %v121, 4
    %v123 = vadd.f32 %v121, %v122
    %v124 = vrot.slane %v123, 2
    %v125 = vadd.f32 %v123, %v124
    %v126 = vrot.slane %v125, 1
    %v127 = vadd.f32 %v125, %v126
    %v128 = vsel %vm92, %v82, 0.0
    %v129 = vrot.slane %v128, 4
    %v130 = vadd.f32 %v128, %v129
    %v131 = vrot.slane %v130, 2
    %v132 = vadd.f32 %v130, %v131
    %v133 = vrot.slane %v132, 1
    %v134 = vadd.f32 %v132, %v133
    %v135 = vsel %vm92, %v81, 0.0
    %v136 = vrot.slane %v135, 4
    %v137 = vadd.f32 %v135, %v136
    %v138 = vrot.slane %v137, 2
    %v139 = vadd.f32 %v137, %v138
    %v140 = vrot.slane %v139, 1
    %v141 = vadd.f32 %v139, %v140
    %v142 = vsel %vm92, %v83, 0.0
    %v143 = vrot.slane %v142, 4
    %v144 = vadd.f32 %v142, %v143
    %v145 = vrot.slane %v144, 2
    %v146 = vadd.f32 %v144, %v145
    %v147 = vrot.slane %v146, 1
    %v148 = vadd.f32 %v146, %v147
    %v157 = vcombine.low %v99, %v106
    %v158 = vcombine.low %v113, %v120
    %v159 = vcombine.low %v127, %v134
    %v160 = vcombine.low %v141, %v148
    %v162 = vunpack.c.l.s4 1966171168
    %v163 = vunpack.c.0.s8 %v162
    %v164 = vlaneseq
    %v165 = vshrl.u32 %v164, 7
    %v166 = vsub.s32 %v163, %v165
    %v167 = vrot.slane %v157, %v166
    %v169 = vunpack.c.l.s4 1966171168
    %v170 = vunpack.c.0.s8 %v169
    %v171 = vlaneseq
    %v172 = vshrl.u32 %v171, 7
    %v173 = vsub.s32 %v170, %v172
    %v174 = vrot.slane %v158, %v173
    %v176 = vunpack.c.l.s4 1966171168
    %v177 = vunpack.c.0.s8 %v176
    %v178 = vlaneseq
    %v179 = vshrl.u32 %v178, 7
    %v180 = vsub.s32 %v177, %v179
    %v181 = vrot.slane %v159, %v180
    %v183 = vunpack.c.l.s4 1966171168
    %v184 = vunpack.c.0.s8 %v183
    %v185 = vlaneseq
    %v186 = vshrl.u32 %v185, 7
    %v187 = vsub.s32 %v184, %v186
    %v188 = vrot.slane %v160, %v187
    %v189 = vcombine.low %v167, %v174
    %v190 = vcombine.low %v181, %v188
    %v192 = vunpack.c.l.s4 1966171168
    %v193 = vunpack.c.0.s8 %v192
    %v194 = vlaneseq
    %v195 = vshrl.u32 %v194, 7
    %v196 = vsub.s32 %v193, %v195
    %v197 = vrot.slane %v189, %v196
    %v199 = vunpack.c.l.s4 1966171168
    %v200 = vunpack.c.0.s8 %v199
    %v201 = vlaneseq
    %v202 = vshrl.u32 %v201, 7
    %v203 = vsub.s32 %v200, %v202
    %v204 = vrot.slane %v190, %v203
    %v205 = vcombine.low %v197, %v204
    %v207 = vadd.f32 %v47, %v205
    %208 = vst [vmem:[#allocation5] sm:$0xff] %v207
    %v209 = vmin.f32 %v35, 0.0
    %v210 = vmin.f32 %v36, 0.0
    %v211 = vld [vmem:[#allocation6] sm:$0xff]
    %v212 = vmul.f32 %v209, %v209
    %v213 = vmul.f32 %v210, %v210
    %v216 = vcombine.high %v212, %v212
    %v218 = vunpack.c.l.s4 1983009808
    %v219 = vunpack.c.0.s8 %v218
    %v220 = vlaneseq
    %v221 = vshrl.u32 %v220, 7
    %v222 = vsub.s32 %v219, %v221
    %v223 = vrot.slane %v212, %v222
    %v225 = vunpack.c.l.s4 1983009808
    %v226 = vunpack.c.0.s8 %v225
    %v227 = vlaneseq
    %v228 = vshrl.u32 %v227, 7
    %v229 = vsub.s32 %v226, %v228
    %v230 = vrot.slane %v216, %v229
    %v231 = vcombine.high %v223, %v223
    %v232 = vcombine.high %v230, %v230
    %v233 = vcombine.high %v213, %v213
    %v235 = vunpack.c.l.s4 1983009808
    %v236 = vunpack.c.0.s8 %v235
    %v237 = vlaneseq
    %v238 = vshrl.u32 %v237, 7
    %v239 = vsub.s32 %v236, %v238
    %v240 = vrot.slane %v213, %v239
    %v242 = vunpack.c.l.s4 1983009808
    %v243 = vunpack.c.0.s8 %v242
    %v244 = vlaneseq
    %v245 = vshrl.u32 %v244, 7
    %v246 = vsub.s32 %v243, %v245
    %v247 = vrot.slane %v233, %v246
    %v248 = vcombine.high %v240, %v240
    %v249 = vcombine.high %v247, %v247
    %v258 = vsel %vm92, %v223, 0.0
    %v259 = vrot.slane %v258, 4
    %v260 = vadd.f32 %v258, %v259
    %v261 = vrot.slane %v260, 2
    %v262 = vadd.f32 %v260, %v261
    %v263 = vrot.slane %v262, 1
    %v264 = vadd.f32 %v262, %v263
    %v265 = vsel %vm92, %v231, 0.0
    %v266 = vrot.slane %v265, 4
    %v267 = vadd.f32 %v265, %v266
    %v268 = vrot.slane %v267, 2
    %v269 = vadd.f32 %v267, %v268
    %v270 = vrot.slane %v269, 1
    %v271 = vadd.f32 %v269, %v270
    %v272 = vsel %vm92, %v230, 0.0
    %v273 = vrot.slane %v272, 4
    %v274 = vadd.f32 %v272, %v273
    %v275 = vrot.slane %v274, 2
    %v276 = vadd.f32 %v274, %v275
    %v277 = vrot.slane %v276, 1
    %v278 = vadd.f32 %v276, %v277
    %v279 = vsel %vm92, %v232, 0.0
    %v280 = vrot.slane %v279, 4
    %v281 = vadd.f32 %v279, %v280
    %v282 = vrot.slane %v281, 2
    %v283 = vadd.f32 %v281, %v282
    %v284 = vrot.slane %v283, 1
    %v285 = vadd.f32 %v283, %v284
    %v286 = vsel %vm92, %v240, 0.0
    %v287 = vrot.slane %v286, 4
    %v288 = vadd.f32 %v286, %v287
    %v289 = vrot.slane %v288, 2
    %v290 = vadd.f32 %v288, %v289
    %v291 = vrot.slane %v290, 1
    %v292 = vadd.f32 %v290, %v291
    %v293 = vsel %vm92, %v248, 0.0
    %v294 = vrot.slane %v293, 4
    %v295 = vadd.f32 %v293, %v294
    %v296 = vrot.slane %v295, 2
    %v297 = vadd.f32 %v295, %v296
    %v298 = vrot.slane %v297, 1
    %v299 = vadd.f32 %v297, %v298
    %v300 = vsel %vm92, %v247, 0.0
    %v301 = vrot.slane %v300, 4
    %v302 = vadd.f32 %v300, %v301
    %v303 = vrot.slane %v302, 2
    %v304 = vadd.f32 %v302, %v303
    %v305 = vrot.slane %v304, 1
    %v306 = vadd.f32 %v304, %v305
    %v307 = vsel %vm92, %v249, 0.0
    %v308 = vrot.slane %v307, 4
    %v309 = vadd.f32 %v307, %v308
    %v310 = vrot.slane %v309, 2
    %v311 = vadd.f32 %v309, %v310
    %v312 = vrot.slane %v311, 1
    %v313 = vadd.f32 %v311, %v312
    %v322 = vcombine.low %v264, %v271
    %v323 = vcombine.low %v278, %v285
    %v324 = vcombine.low %v292, %v299
    %v325 = vcombine.low %v306, %v313
    %v327 = vunpack.c.l.s4 1966171168
    %v328 = vunpack.c.0.s8 %v327
    %v329 = vlaneseq
    %v330 = vshrl.u32 %v329, 7
    %v331 = vsub.s32 %v328, %v330
    %v332 = vrot.slane %v322, %v331
    %v334 = vunpack.c.l.s4 1966171168
    %v335 = vunpack.c.0.s8 %v334
    %v336 = vlaneseq
    %v337 = vshrl.u32 %v336, 7
    %v338 = vsub.s32 %v335, %v337
    %v339 = vrot.slane %v323, %v338
    %v341 = vunpack.c.l.s4 1966171168
    %v342 = vunpack.c.0.s8 %v341
    %v343 = vlaneseq
    %v344 = vshrl.u32 %v343, 7
    %v345 = vsub.s32 %v342, %v344
    %v346 = vrot.slane %v324, %v345
    %v348 = vunpack.c.l.s4 1966171168
    %v349 = vunpack.c.0.s8 %v348
    %v350 = vlaneseq
    %v351 = vshrl.u32 %v350, 7
    %v352 = vsub.s32 %v349, %v351
    %v353 = vrot.slane %v325, %v352
    %v354 = vcombine.low %v332, %v339
    %v355 = vcombine.low %v346, %v353
    %v357 = vunpack.c.l.s4 1966171168
    %v358 = vunpack.c.0.s8 %v357
    %v359 = vlaneseq
    %v360 = vshrl.u32 %v359, 7
    %v361 = vsub.s32 %v358, %v360
    %v362 = vrot.slane %v354, %v361
    %v364 = vunpack.c.l.s4 1966171168
    %v365 = vunpack.c.0.s8 %v364
    %v366 = vlaneseq
    %v367 = vshrl.u32 %v366, 7
    %v368 = vsub.s32 %v365, %v367
    %v369 = vrot.slane %v355, %v368
    %v370 = vcombine.low %v362, %v369
    %v372 = vadd.f32 %v211, %v370
    %373 = vst [vmem:[#allocation6] sm:$0xff] %v372
    // Predicated region
    $region14: #{tpu_custom_call.1} parent=1 // pred_check
      _
    $region15: #{tpu_custom_call.1} parent=1 // pred_check_branch
      %375 = sbr.rel (0) target = $region17
    $region16: #{tpu_custom_call.1} parent=1 // pred_region
      %s377 = ssub.s32 128, 128
      %378 = vsyncadd [#allocation4], %s377
      %s380 = sshll.u32 [#allocation5], 4
      %s381 = int_to_ptr.vmem [resolvable:$true] %s380
      %383 = dma.vmem_to_hbm [thread:$0]  %s381, 128, %s1, [#allocation4]
    $region17: #{tpu_custom_call.1} parent=1 // pred_fallthru
      _
    // Predicated region
    $region18: #{tpu_custom_call.1} parent=1 // pred_check
      _
    $region19: #{tpu_custom_call.1} parent=1 // pred_check_branch
      %385 = sbr.rel (0) target = $region21
    $region20: #{tpu_custom_call.1} parent=1 // pred_region
      %s387 = ssub.s32 128, 128
      %388 = vsyncadd [#allocation7], %s387
      %s390 = sshll.u32 [#allocation6], 4
      %s391 = int_to_ptr.vmem [resolvable:$true] %s390
      %393 = dma.vmem_to_hbm [thread:$0]  %s391, 128, %s2, [#allocation7]
    $region21: #{tpu_custom_call.1} parent=1 // pred_fallthru
      _
    // Predicated region
    $region22: #{tpu_custom_call.1} parent=1 // pred_check
      _
    $region23: #{tpu_custom_call.1} parent=1 // pred_check_branch
      %395 = sbr.rel (0) target = $region25
    $region24: #{tpu_custom_call.1} parent=1 // pred_region
      %396 = dma.done [#allocation4], 128
    $region25: #{tpu_custom_call.1} parent=1 // pred_fallthru
      _
    // Predicated region
    $region26: #{tpu_custom_call.1} parent=1 // pred_check
      _
    $region27: #{tpu_custom_call.1} parent=1 // pred_check_branch
      %398 = sbr.rel (0) target = $region29
    $region28: #{tpu_custom_call.1} parent=1 // pred_region
      %399 = dma.done [#allocation7], 128
    $region29: #{tpu_custom_call.1} parent=1 // pred_fallthru
      _
    %400 = vsyncpa [#allocation3], 1
    %401 = vsyncpa [#allocation4], 1
    %402 = vsyncpa [#allocation7], 1

</llo_original>
